<compile_context>
chip_gen: v7x
topology: tpu7x:2x2x1
jax: 0.10.0
libtpu: 0.0.40
codegen_flags: <defaults>
</compile_context>

<pallas_src>
import functools

import jax
import jax.numpy as jnp
from jax.experimental import pallas as pl
from jax.experimental.pallas import tpu as pltpu


def policy_kernel(x_ref, w1_ref, b1_ref, w2_ref, b2_ref, w3_ref, b3_ref, o_ref):
    """One (TM, feat_dim) row-tile of the 3-layer MLP. Weights are VMEM-resident."""
    x = x_ref[...]

    # Layer 1: Linear(feat_dim, 64) + Tanh   (f32 accumulate on the MXU)
    h1 = jnp.dot(x, w1_ref[...], preferred_element_type=jnp.float32) + b1_ref[...]
    h1 = jnp.tanh(h1)

    # Layer 2: Linear(64, 64) + Tanhshrink   (tanhshrink(z) = z - tanh(z))
    z2 = jnp.dot(h1.astype(w2_ref.dtype), w2_ref[...],
                 preferred_element_type=jnp.float32) + b2_ref[...]
    h2 = z2 - jnp.tanh(z2)

    # Layer 3: Linear(64, act_dim)           (raw logits)
    out = jnp.dot(h2.astype(w3_ref.dtype), w3_ref[...],
                  preferred_element_type=jnp.float32) + b3_ref[...]
    o_ref[...] = out.astype(o_ref.dtype)


@functools.partial(jax.jit, static_argnames=("block_rows", "compute_dtype"))
def policy_forward(feat, params, *, block_rows=1024, compute_dtype=None):
    """Run the Policy forward pass via pallas_call.

    feat:          (batch, feat_dim) float32
    params:        dict of w1 (feat_dim,64), b1 (1,64), w2 (64,64), b2 (1,64),
                   w3 (64,act_dim), b3 (1,act_dim), all float32
    block_rows:    target batch-tile size (rounded to a multiple of 8 sublanes)
    compute_dtype: None -> f32 data path; jnp.bfloat16 -> halve HBM bytes for
                   feat/weights, still f32 accumulation + f32 output.
    returns (batch, act_dim) float32 logits
    """
    batch, feat_dim = feat.shape
    hidden = params["w1"].shape[1]
    act_dim = params["w3"].shape[1]

    # Row tile: multiple of 8 sublanes; cap at the (padded) batch.
    tm = min(block_rows, batch)
    tm = max(8, ((tm + 7) // 8) * 8)
    padded = pl.cdiv(batch, tm) * tm
    if padded != batch:
        feat = jnp.pad(feat, ((0, padded - batch), (0, 0)))

    w1, w2, w3 = params["w1"], params["w2"], params["w3"]
    b1, b2, b3 = params["b1"], params["b2"], params["b3"]
    if compute_dtype is not None:
        # bf16 feat/weights halve the HBM stream; biases stay f32 (added post-matmul,
        # accumulation is f32 via preferred_element_type).
        feat = feat.astype(compute_dtype)
        w1, w2, w3 = (w.astype(compute_dtype) for w in (w1, w2, w3))

    grid = (padded // tm,)

    # Weights/biases: constant block index across the grid -> DMA'd once, VMEM-resident.
    const = lambda i: (0, 0)
    in_specs = [
        pl.BlockSpec((tm, feat_dim), lambda i: (i, 0)),   # feat row tile (pipelined)
        pl.BlockSpec((feat_dim, hidden), const),          # w1
        pl.BlockSpec((1, hidden), const),                 # b1
        pl.BlockSpec((hidden, hidden), const),            # w2
        pl.BlockSpec((1, hidden), const),                 # b2
        pl.BlockSpec((hidden, act_dim), const),           # w3
        pl.BlockSpec((1, act_dim), const),                # b3
    ]
    out_specs = pl.BlockSpec((tm, act_dim), lambda i: (i, 0))

    out = pl.pallas_call(
        policy_kernel,
        out_shape=jax.ShapeDtypeStruct((padded, act_dim), jnp.float32),
        grid=grid,
        in_specs=in_specs,
        out_specs=out_specs,
        compiler_params=pltpu.CompilerParams(
            dimension_semantics=("parallel",),  # megacore sharding on v7x
        ),
    )(feat, w1, b1, w2, b2, w3, b3)

    if padded != batch:
        out = out[:batch]
    return out


def init_policy_params(key, feat_dim, act_dim, hidden=64):
    """Deterministic init mimicking PyTorch nn.Linear default:
    U(-1/sqrt(fan_in), 1/sqrt(fan_in)) for both weights and biases."""
    def linear(k, fan_in, fan_out):
        kw, kb = jax.random.split(k)
        bound = 1.0 / jnp.sqrt(fan_in)
        w = jax.random.uniform(kw, (fan_in, fan_out), jnp.float32, -bound, bound)
        b = jax.random.uniform(kb, (1, fan_out), jnp.float32, -bound, bound)
        return w, b

    k1, k2, k3 = jax.random.split(key, 3)
    w1, b1 = linear(k1, feat_dim, hidden)
    w2, b2 = linear(k2, hidden, hidden)
    w3, b3 = linear(k3, hidden, act_dim)
    return {"w1": w1, "b1": b1, "w2": w2, "b2": b2, "w3": w3, "b3": b3}


def policy_ref(feat, p):
    """Pure-JAX reference of the same forward pass."""
    h1 = jnp.tanh(feat @ p["w1"] + p["b1"])
    z2 = h1 @ p["w2"] + p["b2"]
    h2 = z2 - jnp.tanh(z2)
    return h2 @ p["w3"] + p["b3"]


if __name__ == "__main__":
    feat_dim = 32
    act_dim = 8

    key = jax.random.PRNGKey(0)
    k_params, k_feat_small, k_feat_big = jax.random.split(key, 3)
    params = init_policy_params(k_params, feat_dim, act_dim)

    # 1) Small batch (as in the original module usage), f32 path, tight tolerance.
    batch = 8
    feat = jax.random.normal(k_feat_small, (batch, feat_dim), jnp.float32)
    logits = jax.block_until_ready(policy_forward(feat, params))
    ref = policy_ref(feat, params)
    assert logits.shape == (batch, act_dim)
    assert jnp.allclose(logits, ref, atol=1e-5, rtol=1e-5)

    # 2) Larger, non-tile-aligned batch to exercise the grid + padding path.
    batch2 = 520
    feat2 = jax.random.normal(k_feat_big, (batch2, feat_dim), jnp.float32)
    logits2 = jax.block_until_ready(policy_forward(feat2, params, block_rows=128))
    ref2 = policy_ref(feat2, params)
    assert logits2.shape == (batch2, act_dim)
    assert jnp.allclose(logits2, ref2, atol=1e-5, rtol=1e-5)

    # 3) bf16 data path (halved HBM traffic), looser tolerance.
    logits_bf16 = jax.block_until_ready(
        policy_forward(feat2, params, block_rows=128, compute_dtype=jnp.bfloat16))
    assert logits_bf16.shape == (batch2, act_dim)
    assert jnp.allclose(logits_bf16, ref2, atol=5e-2, rtol=5e-2)

    print("KERNEL_OK")
</pallas_src>

<mosaic_0001>
module attributes {stable_mosaic.version = 11 : i64} {
  func.func @policy_kernel(%arg0: i32, %arg1: memref<8x32xf32, #tpu.memory_space<vmem>>, %arg2: memref<32x64xf32, #tpu.memory_space<vmem>>, %arg3: memref<1x64xf32, #tpu.memory_space<vmem>>, %arg4: memref<64x64xf32, #tpu.memory_space<vmem>>, %arg5: memref<1x64xf32, #tpu.memory_space<vmem>>, %arg6: memref<64x8xf32, #tpu.memory_space<vmem>>, %arg7: memref<1x8xf32, #tpu.memory_space<vmem>>, %arg8: memref<8x8xf32, #tpu.memory_space<vmem>>) attributes {dimension_semantics = [#tpu.dimension_semantics<parallel>], iteration_bounds = array<i64: 1>, scalar_prefetch = 0 : i64, scratch_operands = 0 : i64, tpu.core_type = #tpu.core_type<tc>, window_params = [{transform_indices = @transform_0, window_bounds = array<i64: 8, 32>}, {pipeline_mode = #tpu.pipeline_mode<synchronous>, transform_indices = @transform_1, window_bounds = array<i64: 32, 64>}, {pipeline_mode = #tpu.pipeline_mode<synchronous>, transform_indices = @transform_2, window_bounds = array<i64: 1, 64>}, {pipeline_mode = #tpu.pipeline_mode<synchronous>, transform_indices = @transform_3, window_bounds = array<i64: 64, 64>}, {pipeline_mode = #tpu.pipeline_mode<synchronous>, transform_indices = @transform_4, window_bounds = array<i64: 1, 64>}, {pipeline_mode = #tpu.pipeline_mode<synchronous>, transform_indices = @transform_5, window_bounds = array<i64: 64, 8>}, {pipeline_mode = #tpu.pipeline_mode<synchronous>, transform_indices = @transform_6, window_bounds = array<i64: 1, 8>}, {transform_indices = @transform_7, window_bounds = array<i64: 8, 8>}]} {
    %c0 = arith.constant 0 : index
    %c0_0 = arith.constant 0 : index
    %0 = vector.load %arg1[%c0, %c0_0] : memref<8x32xf32, #tpu.memory_space<vmem>>, vector<8x32xf32>
    %c0_1 = arith.constant 0 : index
    %c0_2 = arith.constant 0 : index
    %1 = vector.load %arg2[%c0_1, %c0_2] : memref<32x64xf32, #tpu.memory_space<vmem>>, vector<32x64xf32>
    %cst = arith.constant dense<0.000000e+00> : vector<8x64xf32>
    %2 = tpu.matmul %0, %1, %cst {dimension_numbers = #tpu.dot_dimension_numbers<[1], [0], [0], [1], [0, 0, 1, 1], [], []>} : vector<8x32xf32>, vector<32x64xf32>, vector<8x64xf32> -> vector<8x64xf32>
    %c0_3 = arith.constant 0 : index
    %c0_4 = arith.constant 0 : index
    %3 = vector.load %arg3[%c0_3, %c0_4] : memref<1x64xf32, #tpu.memory_space<vmem>>, vector<1x64xf32>
    %4 = vector.broadcast %3 : vector<1x64xf32> to vector<8x64xf32>
    %5 = arith.addf %2, %4 : vector<8x64xf32>
    %6 = math.tanh %5 : vector<8x64xf32>
    %c0_5 = arith.constant 0 : index
    %c0_6 = arith.constant 0 : index
    %7 = vector.load %arg4[%c0_5, %c0_6] : memref<64x64xf32, #tpu.memory_space<vmem>>, vector<64x64xf32>
    %cst_7 = arith.constant dense<0.000000e+00> : vector<8x64xf32>
    %8 = tpu.matmul %6, %7, %cst_7 {dimension_numbers = #tpu.dot_dimension_numbers<[1], [0], [0], [1], [0, 0, 1, 1], [], []>} : vector<8x64xf32>, vector<64x64xf32>, vector<8x64xf32> -> vector<8x64xf32>
    %c0_8 = arith.constant 0 : index
    %c0_9 = arith.constant 0 : index
    %9 = vector.load %arg5[%c0_8, %c0_9] : memref<1x64xf32, #tpu.memory_space<vmem>>, vector<1x64xf32>
    %10 = vector.broadcast %9 : vector<1x64xf32> to vector<8x64xf32>
    %11 = arith.addf %8, %10 : vector<8x64xf32>
    %12 = math.tanh %11 : vector<8x64xf32>
    %13 = arith.subf %11, %12 : vector<8x64xf32>
    %c0_10 = arith.constant 0 : index
    %c0_11 = arith.constant 0 : index
    %14 = vector.load %arg6[%c0_10, %c0_11] : memref<64x8xf32, #tpu.memory_space<vmem>>, vector<64x8xf32>
    %cst_12 = arith.constant dense<0.000000e+00> : vector<8x8xf32>
    %15 = tpu.matmul %13, %14, %cst_12 {dimension_numbers = #tpu.dot_dimension_numbers<[1], [0], [0], [1], [0, 0, 1, 1], [], []>} : vector<8x64xf32>, vector<64x8xf32>, vector<8x8xf32> -> vector<8x8xf32>
    %c0_13 = arith.constant 0 : index
    %c0_14 = arith.constant 0 : index
    %16 = vector.load %arg7[%c0_13, %c0_14] : memref<1x8xf32, #tpu.memory_space<vmem>>, vector<1x8xf32>
    %17 = vector.broadcast %16 : vector<1x8xf32> to vector<8x8xf32>
    %18 = arith.addf %15, %17 : vector<8x8xf32>
    %c0_15 = arith.constant 0 : index
    %c0_16 = arith.constant 0 : index
    %19 = vector.load %arg8[%c0_15, %c0_16] : memref<8x8xf32, #tpu.memory_space<vmem>>, vector<8x8xf32>
    tpu.vector_store %arg8[%c0_15, %c0_16], %18 {strides = array<i32>} : memref<8x8xf32, #tpu.memory_space<vmem>>, vector<8x8xf32>,
    return
  }
  func.func @transform_0(%arg0: i32) -> (i32, i32) {
    %c0_i32 = arith.constant 0 : i32
    %c0_i32_0 = arith.constant 0 : i32
    return %arg0, %c0_i32 : i32, i32
  }
  func.func @transform_1(%arg0: i32) -> (i32, i32) {
    %c0_i32 = arith.constant 0 : i32
    %c0_i32_0 = arith.constant 0 : i32
    %c0_i32_1 = arith.constant 0 : i32
    return %c0_i32, %c0_i32_0 : i32, i32
  }
  func.func @transform_2(%arg0: i32) -> (i32, i32) {
    %c0_i32 = arith.constant 0 : i32
    %c0_i32_0 = arith.constant 0 : i32
    %c0_i32_1 = arith.constant 0 : i32
    return %c0_i32, %c0_i32_0 : i32, i32
  }
  func.func @transform_3(%arg0: i32) -> (i32, i32) {
    %c0_i32 = arith.constant 0 : i32
    %c0_i32_0 = arith.constant 0 : i32
    %c0_i32_1 = arith.constant 0 : i32
    return %c0_i32, %c0_i32_0 : i32, i32
  }
  func.func @transform_4(%arg0: i32) -> (i32, i32) {
    %c0_i32 = arith.constant 0 : i32
    %c0_i32_0 = arith.constant 0 : i32
    %c0_i32_1 = arith.constant 0 : i32
    return %c0_i32, %c0_i32_0 : i32, i32
  }
  func.func @transform_5(%arg0: i32) -> (i32, i32) {
    %c0_i32 = arith.constant 0 : i32
    %c0_i32_0 = arith.constant 0 : i32
    %c0_i32_1 = arith.constant 0 : i32
    return %c0_i32, %c0_i32_0 : i32, i32
  }
  func.func @transform_6(%arg0: i32) -> (i32, i32) {
    %c0_i32 = arith.constant 0 : i32
    %c0_i32_0 = arith.constant 0 : i32
    %c0_i32_1 = arith.constant 0 : i32
    return %c0_i32, %c0_i32_0 : i32, i32
  }
  func.func @transform_7(%arg0: i32) -> (i32, i32) {
    %c0_i32 = arith.constant 0 : i32
    %c0_i32_0 = arith.constant 0 : i32
    return %arg0, %c0_i32 : i32, i32
  }
}

</mosaic_0001>

<llo_original>
// kernel: policy_forward.1
$region0: #{policy_forward.1}
  #allocation0 [shape = 'u32[]', space=smem, size = 0x4, offset = 0x4, fixed_abs, tag = 'smem constant byte address 0x4 - core index']
  #allocation1 [shape = 'u32[144,128]{1,0:T(1,128)}', space=vmem, size = 0x12000, scoped, tag = 'internal scratch']
  %s0 = inlined_call_operand.vmem [shape: f32[8,32], index: 0, kind: input, shape index: {}]
  %s1 = inlined_call_operand.hbm [shape: f32[32,64], index: 1, kind: input, shape index: {}]
  %s2 = inlined_call_operand.vmem [shape: f32[1,64], index: 2, kind: input, shape index: {}]
  %s3 = inlined_call_operand.vmem [shape: f32[64,64], index: 3, kind: input, shape index: {}]
  %s4 = inlined_call_operand.vmem [shape: f32[1,64], index: 4, kind: input, shape index: {}]
  %s5 = inlined_call_operand.vmem [shape: f32[64,8], index: 5, kind: input, shape index: {}]
  %s6 = inlined_call_operand.vmem [shape: f32[1,8], index: 6, kind: input, shape index: {}]
  %s7 = inlined_call_operand.hbm [shape: f32[8,8], index: 7, kind: output, shape index: {}]
  %s8 = sld [smem:[#allocation0]]
  $region42: #{policy_forward.1} parent=0
    _
  %s10 = ssub.s32 1, %s8
  %s11 = scalar_select 0, %s10, %s8
  $region1: #{policy_forward.1} parent=0
    #allocation2 [shape = 'u8[16384]{0}', space=vmem, size = 0x4000, scoped, tag = 'input window, operand 1, single buffered']
    #allocation3 [shape = 's32[1]{0}', space=sflag, size = 0x4, scoped, tag = 'scoped memory for policy_forward.1']
    #allocation4 [shape = 's32[1]{0}', space=sflag, size = 0x4, scoped, tag = 'scoped memory for policy_forward.1']
    #allocation5 [shape = 'u8[4096]{0}', space=vmem, size = 0x1000, scoped, tag = 'output window, operand 0, single buffered']
    %12 = vsyncpa [#allocation3], 0
    %13 = vsyncpa [#allocation4], 0
    // Predicated region
    $region2: #{policy_forward.1} parent=1 // pred_check
      _
    $region3: #{policy_forward.1} parent=1 // pred_check_branch
      %15 = sbr.rel (0) target = $region5
    $region4: #{policy_forward.1} parent=1 // pred_region
      _
    $region5: #{policy_forward.1} parent=1 // pred_fallthru
      _
    // Predicated region
    $region6: #{policy_forward.1} parent=1 // pred_check
      _
    $region7: #{policy_forward.1} parent=1 // pred_check_branch
      %17 = sbr.rel (0) target = $region9
    $region8: #{policy_forward.1} parent=1 // pred_region
      %s19 = ssub.s32 512, 512
      %20 = vsyncadd [#allocation3], %s19
      %s21 = sshll.u32 [#allocation2], 4
      %s22 = int_to_ptr.vmem [resolvable:$true] %s21
      %27 = dma.hbm_to_vmem [thread:$0]  %s1, 512, %s22, [#allocation3], 128, 128, 8
    $region9: #{policy_forward.1} parent=1 // pred_fallthru
      _
    // Predicated region
    $region10: #{policy_forward.1} parent=1 // pred_check
      _
    $region11: #{policy_forward.1} parent=1 // pred_check_branch
      %29 = sbr.rel (0) target = $region13
    $region12: #{policy_forward.1} parent=1 // pred_region
      _
    $region13: #{policy_forward.1} parent=1 // pred_fallthru
      _
    // Predicated region
    $region14: #{policy_forward.1} parent=1 // pred_check
      _
    $region15: #{policy_forward.1} parent=1 // pred_check_branch
      %31 = sbr.rel (0) target = $region17
    $region16: #{policy_forward.1} parent=1 // pred_region
      _
    $region17: #{policy_forward.1} parent=1 // pred_fallthru
      _
    // Predicated region
    $region18: #{policy_forward.1} parent=1 // pred_check
      _
    $region19: #{policy_forward.1} parent=1 // pred_check_branch
      %33 = sbr.rel (0) target = $region21
    $region20: #{policy_forward.1} parent=1 // pred_region
      _
    $region21: #{policy_forward.1} parent=1 // pred_fallthru
      _
    // Predicated region
    $region22: #{policy_forward.1} parent=1 // pred_check
      _
    $region23: #{policy_forward.1} parent=1 // pred_check_branch
      %35 = sbr.rel (0) target = $region25
    $region24: #{policy_forward.1} parent=1 // pred_region
      _
    $region25: #{policy_forward.1} parent=1 // pred_fallthru
      _
    // Predicated region
    $region26: #{policy_forward.1} parent=1 // pred_check
      _
    $region27: #{policy_forward.1} parent=1 // pred_check_branch
      %37 = sbr.rel (0) target = $region29
    $region28: #{policy_forward.1} parent=1 // pred_region
      _
    $region29: #{policy_forward.1} parent=1 // pred_fallthru
      _
    // Predicated region
    $region30: #{policy_forward.1} parent=1 // pred_check
      _
    $region31: #{policy_forward.1} parent=1 // pred_check_branch
      %39 = sbr.rel (0) target = $region33
    $region32: #{policy_forward.1} parent=1 // pred_region
      %40 = dma.done [#allocation3], 512
    $region33: #{policy_forward.1} parent=1 // pred_fallthru
      _
    %v41 = vld [vmem:[%s0] sm:$0xff]
    %v42 = vld [vmem:[#allocation2] sm:$0xff]
    %v43 = vld [vmem:[#allocation2 + $0x8] sm:$0xff]
    %v44 = vld [vmem:[#allocation2 + $0x10] sm:$0xff]
    %v45 = vld [vmem:[#allocation2 + $0x18] sm:$0xff]
    %v46 = vld [vmem:[%s2] sm:$0x1]
    %v48 = vlaneseq
    %v49 = vshrl.u32 %v48, 7
    %v50 = vsub.s32 0, %v49
    %v51 = vrot.slane %v46, %v50
    %vm53 = vcmask 261120
    %v55 = vsel %vm53, %v41, 0
    %57 = vmatprep.subr.mxu0 0.0
    %58 = vmatpush1.msra.mxu0 %v42
    %59 = vmatprep.subr.mxu0 0.0
    %60 = vmatpush1.msra.mxu0 %v43
    %61 = vmatprep.subr.mxu0 0.0
    %62 = vmatpush1.msra.mxu0 %v44
    %63 = vmatprep.subr.mxu0 0.0
    %64 = vmatpush1.msra.mxu0 %v45
    %65 = vmatprep.subr.mxu0 0.0
    %66 = vmatpush1.msra.mxu0 0.0
    %67 = vmatprep.subr.mxu0 0.0
    %68 = vmatpush1.msra.mxu0 0.0
    %69 = vmatprep.subr.mxu0 0.0
    %70 = vmatpush1.msra.mxu0 0.0
    %71 = vmatprep.subr.mxu0 0.0
    %72 = vmatpush1.msra.mxu0 0.0
    %73 = vmatprep.subr.mxu0 0.0
    %74 = vmatpush1.msra.mxu0 0.0
    %75 = vmatprep.subr.mxu0 0.0
    %76 = vmatpush1.msra.mxu0 0.0
    %77 = vmatprep.subr.mxu0 0.0
    %78 = vmatpush1.msra.mxu0 0.0
    %79 = vmatprep.subr.mxu0 0.0
    %80 = vmatpush1.msra.mxu0 0.0
    %81 = vmatprep.subr.mxu0 0.0
    %82 = vmatpush1.msra.mxu0 0.0
    %83 = vmatprep.subr.mxu0 0.0
    %84 = vmatpush1.msra.mxu0 0.0
    %85 = vmatprep.subr.mxu0 0.0
    %86 = vmatpush1.msra.mxu0 0.0
    %87 = vmatprep.subr.mxu0 0.0
    %88 = vmatpush1.msra.mxu0 0.0
    %89 = vmatprep.subr.mxu0 0.0
    %90 = vmatpush1.msra.mxu0 0.0
    %91 = vmatprep.subr.mxu0 0.0
    %92 = vmatpush1.msra.mxu0 0.0
    %93 = vmatprep.subr.mxu0 0.0
    %94 = vmatpush1.msra.mxu0 0.0
    %95 = vmatprep.subr.mxu0 0.0
    %96 = vmatpush1.msra.mxu0 0.0
    %97 = vmatprep.subr.mxu0 0.0
    %98 = vmatpush1.msra.mxu0 0.0
    %99 = vmatprep.subr.mxu0 0.0
    %100 = vmatpush1.msra.mxu0 0.0
    %101 = vmatprep.subr.mxu0 0.0
    %102 = vmatpush1.msra.mxu0 0.0
    %103 = vmatprep.subr.mxu0 0.0
    %104 = vmatpush1.msra.mxu0 0.0
    %105 = vmatprep.subr.mxu0 0.0
    %106 = vmatpush1.msra.mxu0 0.0
    %107 = vmatprep.subr.mxu0 0.0
    %108 = vmatpush1.msra.mxu0 0.0
    %109 = vmatprep.subr.mxu0 0.0
    %110 = vmatpush1.msra.mxu0 0.0
    %111 = vmatprep.subr.mxu0 0.0
    %112 = vmatpush1.msra.mxu0 0.0
    %113 = vmatprep.subr.mxu0 0.0
    %114 = vmatpush1.msra.mxu0 0.0
    %115 = vmatprep.subr.mxu0 0.0
    %116 = vmatpush1.msra.mxu0 0.0
    %117 = vmatprep.subr.mxu0 0.0
    %118 = vmatpush1.msra.mxu0 0.0
    %119 = vmatprep.subr.mxu0 0.0
    %120 = vmatpush1.msra.mxu0 0.0
    %121 = vmatprep.mubr.f32.mxu0 0.0
    %122 = vmatmul.mubr.f32.gmra.mrb[0].mxu0 %v55
    %v123 = vpop.f32.mrb[0].mxu0
    %v124 = vadd.f32 %v51, %v123
    %v125 = vpop.f32.mrb[0].mxu0
    %126 = vdwg.mxu0
    %v127 = vtanh.pop %v124
    %v128 = vld [vmem:[%s3] sm:$0xff]
    %v129 = vld [vmem:[%s3 + $0x8] sm:$0xff]
    %v130 = vld [vmem:[%s3 + $0x10] sm:$0xff]
    %v131 = vld [vmem:[%s3 + $0x18] sm:$0xff]
    %v132 = vld [vmem:[%s3 + $0x20] sm:$0xff]
    %v133 = vld [vmem:[%s3 + $0x28] sm:$0xff]
    %v134 = vld [vmem:[%s3 + $0x30] sm:$0xff]
    %v135 = vld [vmem:[%s3 + $0x38] sm:$0xff]
    %v136 = vld [vmem:[%s4] sm:$0x1]
    %v138 = vlaneseq
    %v139 = vshrl.u32 %v138, 7
    %v140 = vsub.s32 0, %v139
    %v141 = vrot.slane %v136, %v140
    %vm143 = vcmask 523264
    %v145 = vsel %vm143, %v127, 0
    %147 = vmatprep.subr.mxu0 0.0
    %148 = vmatpush1.msra.mxu0 %v128
    %149 = vmatprep.subr.mxu0 0.0
    %150 = vmatpush1.msra.mxu0 %v129
    %151 = vmatprep.subr.mxu0 0.0
    %152 = vmatpush1.msra.mxu0 %v130
    %153 = vmatprep.subr.mxu0 0.0
    %154 = vmatpush1.msra.mxu0 %v131
    %155 = vmatprep.subr.mxu0 0.0
    %156 = vmatpush1.msra.mxu0 %v132
    %157 = vmatprep.subr.mxu0 0.0
    %158 = vmatpush1.msra.mxu0 %v133
    %159 = vmatprep.subr.mxu0 0.0
    %160 = vmatpush1.msra.mxu0 %v134
    %161 = vmatprep.subr.mxu0 0.0
    %162 = vmatpush1.msra.mxu0 %v135
    %163 = vmatprep.subr.mxu0 0.0
    %164 = vmatpush1.msra.mxu0 0.0
    %165 = vmatprep.subr.mxu0 0.0
    %166 = vmatpush1.msra.mxu0 0.0
    %167 = vmatprep.subr.mxu0 0.0
    %168 = vmatpush1.msra.mxu0 0.0
    %169 = vmatprep.subr.mxu0 0.0
    %170 = vmatpush1.msra.mxu0 0.0
    %171 = vmatprep.subr.mxu0 0.0
    %172 = vmatpush1.msra.mxu0 0.0
    %173 = vmatprep.subr.mxu0 0.0
    %174 = vmatpush1.msra.mxu0 0.0
    %175 = vmatprep.subr.mxu0 0.0
    %176 = vmatpush1.msra.mxu0 0.0
    %177 = vmatprep.subr.mxu0 0.0
    %178 = vmatpush1.msra.mxu0 0.0
    %179 = vmatprep.subr.mxu0 0.0
    %180 = vmatpush1.msra.mxu0 0.0
    %181 = vmatprep.subr.mxu0 0.0
    %182 = vmatpush1.msra.mxu0 0.0
    %183 = vmatprep.subr.mxu0 0.0
    %184 = vmatpush1.msra.mxu0 0.0
    %185 = vmatprep.subr.mxu0 0.0
    %186 = vmatpush1.msra.mxu0 0.0
    %187 = vmatprep.subr.mxu0 0.0
    %188 = vmatpush1.msra.mxu0 0.0
    %189 = vmatprep.subr.mxu0 0.0
    %190 = vmatpush1.msra.mxu0 0.0
    %191 = vmatprep.subr.mxu0 0.0
    %192 = vmatpush1.msra.mxu0 0.0
    %193 = vmatprep.subr.mxu0 0.0
    %194 = vmatpush1.msra.mxu0 0.0
    %195 = vmatprep.subr.mxu0 0.0
    %196 = vmatpush1.msra.mxu0 0.0
    %197 = vmatprep.subr.mxu0 0.0
    %198 = vmatpush1.msra.mxu0 0.0
    %199 = vmatprep.subr.mxu0 0.0
    %200 = vmatpush1.msra.mxu0 0.0
    %201 = vmatprep.subr.mxu0 0.0
    %202 = vmatpush1.msra.mxu0 0.0
    %203 = vmatprep.subr.mxu0 0.0
    %204 = vmatpush1.msra.mxu0 0.0
    %205 = vmatprep.subr.mxu0 0.0
    %206 = vmatpush1.msra.mxu0 0.0
    %207 = vmatprep.subr.mxu0 0.0
    %208 = vmatpush1.msra.mxu0 0.0
    %209 = vmatprep.subr.mxu0 0.0
    %210 = vmatpush1.msra.mxu0 0.0
    %211 = vmatprep.mubr.f32.mxu0 0.0
    %212 = vmatmul.mubr.f32.gmra.mrb[0].mxu0 %v145
    %v213 = vpop.f32.mrb[0].mxu0
    %v214 = vadd.f32 %v141, %v213
    %v215 = vpop.f32.mrb[0].mxu0
    %216 = vdwg.mxu0
    %v217 = vtanh.pop %v214
    %v218 = vsub.f32 %v214, %v217
    %v219 = vld [vmem:[%s5] sm:$0xff]
    %v220 = vld [vmem:[%s5 + $0x8] sm:$0xff]
    %v221 = vld [vmem:[%s5 + $0x10] sm:$0xff]
    %v222 = vld [vmem:[%s5 + $0x18] sm:$0xff]
    %v223 = vld [vmem:[%s5 + $0x20] sm:$0xff]
    %v224 = vld [vmem:[%s5 + $0x28] sm:$0xff]
    %v225 = vld [vmem:[%s5 + $0x30] sm:$0xff]
    %v226 = vld [vmem:[%s5 + $0x38] sm:$0xff]
    %v227 = vld [vmem:[%s6] sm:$0x1]
    %v229 = vlaneseq
    %v230 = vshrl.u32 %v229, 7
    %v231 = vsub.s32 0, %v230
    %v232 = vrot.slane %v227, %v231
    %v235 = vsel %vm143, %v218, 0
    %237 = vmatprep.subr.mxu0 0.0
    %238 = vmatpush1.msra.mxu0 %v219
    %239 = vmatprep.subr.mxu0 0.0
    %240 = vmatpush1.msra.mxu0 %v220
    %241 = vmatprep.subr.mxu0 0.0
    %242 = vmatpush1.msra.mxu0 %v221
    %243 = vmatprep.subr.mxu0 0.0
    %244 = vmatpush1.msra.mxu0 %v222
    %245 = vmatprep.subr.mxu0 0.0
    %246 = vmatpush1.msra.mxu0 %v223
    %247 = vmatprep.subr.mxu0 0.0
    %248 = vmatpush1.msra.mxu0 %v224
    %249 = vmatprep.subr.mxu0 0.0
    %250 = vmatpush1.msra.mxu0 %v225
    %251 = vmatprep.subr.mxu0 0.0
    %252 = vmatpush1.msra.mxu0 %v226
    %253 = vmatprep.subr.mxu0 0.0
    %254 = vmatpush1.msra.mxu0 0.0
    %255 = vmatprep.subr.mxu0 0.0
    %256 = vmatpush1.msra.mxu0 0.0
    %257 = vmatprep.subr.mxu0 0.0
    %258 = vmatpush1.msra.mxu0 0.0
    %259 = vmatprep.subr.mxu0 0.0
    %260 = vmatpush1.msra.mxu0 0.0
    %261 = vmatprep.subr.mxu0 0.0
    %262 = vmatpush1.msra.mxu0 0.0
    %263 = vmatprep.subr.mxu0 0.0
    %264 = vmatpush1.msra.mxu0 0.0
    %265 = vmatprep.subr.mxu0 0.0
    %266 = vmatpush1.msra.mxu0 0.0
    %267 = vmatprep.subr.mxu0 0.0
    %268 = vmatpush1.msra.mxu0 0.0
    %269 = vmatprep.subr.mxu0 0.0
    %270 = vmatpush1.msra.mxu0 0.0
    %271 = vmatprep.subr.mxu0 0.0
    %272 = vmatpush1.msra.mxu0 0.0
    %273 = vmatprep.subr.mxu0 0.0
    %274 = vmatpush1.msra.mxu0 0.0
    %275 = vmatprep.subr.mxu0 0.0
    %276 = vmatpush1.msra.mxu0 0.0
    %277 = vmatprep.subr.mxu0 0.0
    %278 = vmatpush1.msra.mxu0 0.0
    %279 = vmatprep.subr.mxu0 0.0
    %280 = vmatpush1.msra.mxu0 0.0
    %281 = vmatprep.subr.mxu0 0.0
    %282 = vmatpush1.msra.mxu0 0.0
    %283 = vmatprep.subr.mxu0 0.0
    %284 = vmatpush1.msra.mxu0 0.0
    %285 = vmatprep.subr.mxu0 0.0
    %286 = vmatpush1.msra.mxu0 0.0
    %287 = vmatprep.subr.mxu0 0.0
    %288 = vmatpush1.msra.mxu0 0.0
    %289 = vmatprep.subr.mxu0 0.0
    %290 = vmatpush1.msra.mxu0 0.0
    %291 = vmatprep.subr.mxu0 0.0
    %292 = vmatpush1.msra.mxu0 0.0
    %293 = vmatprep.subr.mxu0 0.0
    %294 = vmatpush1.msra.mxu0 0.0
    %295 = vmatprep.subr.mxu0 0.0
    %296 = vmatpush1.msra.mxu0 0.0
    %297 = vmatprep.subr.mxu0 0.0
    %298 = vmatpush1.msra.mxu0 0.0
    %299 = vmatprep.subr.mxu0 0.0
    %300 = vmatpush1.msra.mxu0 0.0
    %301 = vmatprep.mubr.f32.mxu0 0.0
    %302 = vmatmul.mubr.f32.gmra.mrb[0].mxu0 %v235
    %v303 = vpop.f32.mrb[0].mxu0
    %v304 = vadd.f32 %v232, %v303
    %v305 = vpop.f32.mrb[0].mxu0
    %306 = vdwg.mxu0
    %vm307 = vcmask 64512
    %308 = vst.msk [vmem:[#allocation5] sm:$0xff] %vm307, %v304
    // Predicated region
    $region34: #{policy_forward.1} parent=1 // pred_check
      _
    $region35: #{policy_forward.1} parent=1 // pred_check_branch
      %310 = sbr.rel (0) target = $region37
    $region36: #{policy_forward.1} parent=1 // pred_region
      %s312 = ssub.s32 128, 128
      %313 = vsyncadd [#allocation4], %s312
      %s315 = sshll.u32 [#allocation5], 4
      %s316 = int_to_ptr.vmem [resolvable:$true] %s315
      %318 = dma.vmem_to_hbm [thread:$0]  %s316, 128, %s7, [#allocation4]
    $region37: #{policy_forward.1} parent=1 // pred_fallthru
      _
    // Predicated region
    $region38: #{policy_forward.1} parent=1 // pred_check
      _
    $region39: #{policy_forward.1} parent=1 // pred_check_branch
      %320 = sbr.rel (0) target = $region41
    $region40: #{policy_forward.1} parent=1 // pred_region
      %321 = dma.done [#allocation4], 128
    $region41: #{policy_forward.1} parent=1 // pred_fallthru
      _
    %322 = vsyncpa [#allocation3], 1
    %323 = vsyncpa [#allocation4], 1

</llo_original>
